<compile_context>
chip_gen: v5e
topology: v5e:2x2
jax: 0.10.0
libtpu: 0.0.40
codegen_flags: <defaults>
</compile_context>

<pallas_src>
import jax
import jax.numpy as jnp
from jax.experimental import pallas as pl
from jax.experimental.pallas import tpu as pltpu


def unflatten_view(x, C, H, W):
    """Recommended production path: metadata-only reshape (zero HBM traffic)."""
    return x.reshape(x.shape[0], C, H, W)


def _copy_kernel(x_ref, o_ref):
    # Pure lane-dense block copy: (tb, tf) -> (tb, tf). No in-kernel reshape.
    o_ref[...] = x_ref[...]


def unflatten(x, C, H, W):
    """x: (B, C*H*W) -> (B, C, H, W), row-major (torch .view) semantics.

    Runs the data through a lane-dense Pallas copy kernel, then applies the
    (metadata-only) reshape.  See `unflatten_view` for the zero-cost variant.
    """
    B, F = x.shape
    assert F == C * H * W, f"expected last dim {C * H * W}, got {F}"

    itemsize = x.dtype.itemsize
    # Packed-sublane multiple per dtype width (8 for 4B, 16 for 2B, 32 for 1B).
    sm = {4: 8, 2: 16, 1: 32}.get(itemsize, 8)
    target_block_bytes = 4 << 20  # ~4 MiB per buffer: measured HBM-roofline sweet spot

    # ---- batch tile -------------------------------------------------------
    if B <= sm:
        tb = B  # full batch extent (block dim == full array dim is allowed)
    else:
        tb = min((B // sm) * sm, 256)

    # ---- F tile (multiple of 128, or the full row) ------------------------
    if F <= 128 or tb * F * itemsize <= target_block_bytes:
        tf = F
    else:
        tf = max(128, (target_block_bytes // (tb * itemsize)) // 128 * 128)
        tf = min(tf, (F // 128) * 128)

    # ---- guarantee >= 2 grid steps so v7x's second TensorCore isn't idle --
    if pl.cdiv(B, tb) * pl.cdiv(F, tf) == 1 and F > 128:
        tf = max(128, ((F + 1) // 2) // 128 * 128)

    nb = pl.cdiv(B, tb)
    nf = pl.cdiv(F, tf)

    # VMEM budget derived from the actual block size: 2 in + 2 out buffers
    # (double buffering) plus headroom.  Stays within v7x's 64 MiB VMEM and
    # raises v5e's 16 MiB scoped default when needed.
    block_bytes = tb * tf * itemsize
    vmem_limit = min(64 << 20, max(8 << 20, 4 * block_bytes + (2 << 20)))

    flat = pl.pallas_call(
        _copy_kernel,
        out_shape=jax.ShapeDtypeStruct((B, F), x.dtype),
        grid_spec=pl.GridSpec(
            grid=(nb, nf),
            in_specs=[pl.BlockSpec((tb, tf), lambda b, f: (b, f))],
            out_specs=pl.BlockSpec((tb, tf), lambda b, f: (b, f)),
        ),
        compiler_params=pltpu.CompilerParams(
            dimension_semantics=("parallel", "parallel"),
            vmem_limit_bytes=vmem_limit,
        ),
    )(x)

    # Row-major unflatten of a contiguous (B, F) array: metadata-only reshape,
    # identical to torch .view(B, C, H, W).
    return flat.reshape(B, C, H, W)


if __name__ == "__main__":
    # Small shapes consistent with the module: B=2, C=4, H=16, W=16
    B, C, H, W = 2, 4, 16, 16
    key = jax.random.PRNGKey(0)
    x = jax.random.normal(key, (B, C * H * W), dtype=jnp.float32)

    out = jax.block_until_ready(unflatten(x, C, H, W))

    # Reference check against plain reshape (identical to torch .view semantics)
    ref = x.reshape(B, C, H, W)
    assert out.shape == (B, C, H, W)
    assert out.dtype == x.dtype
    assert bool(jnp.array_equal(out, ref))
    assert bool(jnp.array_equal(unflatten_view(x, C, H, W), ref))

    print("KERNEL_OK")
</pallas_src>

<mosaic_0001>
module attributes {stable_mosaic.version = 11 : i64} {
  func.func @_copy_kernel(%arg0: i32, %arg1: i32, %arg2: memref<2x512xf32, #tpu.memory_space<vmem>>, %arg3: memref<2x512xf32, #tpu.memory_space<vmem>>) attributes {dimension_semantics = [#tpu.dimension_semantics<parallel>, #tpu.dimension_semantics<parallel>], iteration_bounds = array<i64: 1, 2>, scalar_prefetch = 0 : i64, scratch_operands = 0 : i64, tpu.core_type = #tpu.core_type<tc>, window_params = [{transform_indices = @transform_0, window_bounds = array<i64: 2, 512>}, {transform_indices = @transform_1, window_bounds = array<i64: 2, 512>}]} {
    %c0 = arith.constant 0 : index
    %c0_0 = arith.constant 0 : index
    %0 = vector.load %arg2[%c0, %c0_0] : memref<2x512xf32, #tpu.memory_space<vmem>>, vector<2x512xf32>
    %c0_1 = arith.constant 0 : index
    %c0_2 = arith.constant 0 : index
    %1 = vector.load %arg3[%c0_1, %c0_2] : memref<2x512xf32, #tpu.memory_space<vmem>>, vector<2x512xf32>
    tpu.vector_store %arg3[%c0_1, %c0_2], %0 {strides = array<i32>} : memref<2x512xf32, #tpu.memory_space<vmem>>, vector<2x512xf32>,
    return
  }
  func.func @transform_0(%arg0: i32, %arg1: i32) -> (i32, i32) {
    %c0_i32 = arith.constant 0 : i32
    return %arg0, %arg1 : i32, i32
  }
  func.func @transform_1(%arg0: i32, %arg1: i32) -> (i32, i32) {
    %c0_i32 = arith.constant 0 : i32
    return %arg0, %arg1 : i32, i32
  }
}

</mosaic_0001>

<llo_original>
// kernel: tpu_custom_call.1
$region0: #{tpu_custom_call.1}
  #allocation0 [shape = 'u32[]', space=smem, size = 0x4, offset = 0x4, fixed_abs, tag = 'smem constant byte address 0x4 - core index']
  #allocation1 [shape = 'u32[72,128]{1,0:T(1,128)}', space=vmem, size = 0x9000, scoped, tag = 'internal scratch']
  %s0 = inlined_call_operand.hbm [shape: f32[2,1024], index: 0, kind: input, shape index: {}]
  %s1 = inlined_call_operand.hbm [shape: f32[2,1024], index: 1, kind: output, shape index: {}]
  %s2 = sld [smem:[#allocation0]]
  $region41: #{tpu_custom_call.1} parent=0
    _
  %s4 = ssub.s32 1, %s2
  %s5 = scalar_select 0, %s4, %s2
  $region1: #{tpu_custom_call.1} parent=0
    #allocation2 [shape = 'u8[8192]{0}', space=vmem, size = 0x2000, scoped, tag = 'input window, operand 0']
    #allocation3 [shape = 's32[2]{0}', space=sflag, size = 0x8, scoped, tag = 'scoped memory for tpu_custom_call.1']
    #allocation4 [shape = 's32[2]{0}', space=sflag, size = 0x8, scoped, tag = 'scoped memory for tpu_custom_call.1']
    #allocation5 [shape = 'u8[8192]{0}', space=vmem, size = 0x2000, scoped, tag = 'output window, operand 0']
    %6 = vsyncpa [#allocation3], 0
    %s7 = scalar_lea.sflag [#allocation3], 1
    %8 = vsyncpa %s7, 0
    %9 = vsyncpa [#allocation4], 0
    %s10 = scalar_lea.sflag [#allocation4], 1
    %11 = vsyncpa %s10, 0
    loop: start=0, step=1, limit=4
    $region2: #{tpu_custom_call.1} parent=1 // loop_pre_header
      _
    $region3: #{tpu_custom_call.1} parent=1 // loop_header
      %s13 = sphi 0, %s17
      %p14 = scmp.ge.s32.totalorder %s13, 4
      %s20 = sphi 0, %s32
      %s21 = sphi 0, %s28
      %s22 = sphi 0, %s20
      %s23 = sphi 0, %s21
      %s24 = sphi 0, %s22
      %s25 = sphi 0, %s23
      %s37 = sphi 0, %s39
      %s40 = sphi 0, %s37
      %s41 = sphi 0, %s40
      %s57 = sphi 0, %s41
      %s65 = sphi 0, %s67
      %s68 = sphi 0, %s65
      %s69 = sphi 0, %s68
      %s85 = sphi 0, %s69
    $region4: #{tpu_custom_call.1} parent=1 // loop_header_branch
      %16 = sbr.rel (%p14) target = $region8
    $region5: #{tpu_custom_call.1} parent=1 // loop_body
      %s18 = ssub.s32 %s13, 1
      %s19 = ssub.s32 %s13, 2
      %s26 = sadd.s32 1, %s21
      %p27 = scmp.ge.s32.totalorder %s26, 2
      %s28 = scalar_select %p27, 0, %s26
      %s29 = sadd.s32 1, %s20
      %s30 = scalar_select %p27, %s29, %s20
      %p31 = scmp.ge.s32.totalorder %s30, 1
      %s32 = scalar_select %p31, 0, %s30
      %s33 = ssub.s32 %s20, %s32
      %s34 = ssub.s32 %s21, %s28
      %s35 = sor.u32 %s33, %s34
      %p36 = scmp.eq.s32.totalorder %s35, 0
      %s38 = sadd.s32 %s37, 1
      %s39 = scalar_select %p36, %s37, %s38
      %p42 = pneg %p36
      %p43 = scmp.eq.s32.totalorder %s13, 1
      %p44 = por %p42, %p43
      %p45 = scmp.ne.s32.totalorder %s37, %s40
      %p46 = scmp.eq.s32.totalorder %s13, 0
      %p47 = por %p45, %p46
      %p48 = scmp.ne.s32.totalorder %s37, %s40
      %p49 = scmp.eq.s32.totalorder %s18, 1
      %p50 = por %p48, %p49
      %p51 = scmp.ne.s32.totalorder %s40, %s41
      %p52 = scmp.eq.s32.totalorder %s18, 0
      %p53 = por %p51, %p52
      %p54 = scmp.ne.s32.totalorder %s40, %s41
      %p55 = scmp.eq.s32.totalorder %s19, 1
      %p56 = por %p54, %p55
      %p58 = scmp.ne.s32.totalorder %s41, %s57
      %p59 = scmp.eq.s32.totalorder %s19, 0
      %p60 = por %p58, %p59
      %s61 = ssub.s32 %s20, %s32
      %s62 = ssub.s32 %s21, %s28
      %s63 = sor.u32 %s61, %s62
      %p64 = scmp.eq.s32.totalorder %s63, 0
      %s66 = sadd.s32 %s65, 1
      %s67 = scalar_select %p64, %s65, %s66
      %p70 = pneg %p64
      %p71 = scmp.eq.s32.totalorder %s13, 1
      %p72 = por %p70, %p71
      %p73 = scmp.ne.s32.totalorder %s65, %s68
      %p74 = scmp.eq.s32.totalorder %s13, 0
      %p75 = por %p73, %p74
      %p76 = scmp.ne.s32.totalorder %s65, %s68
      %p77 = scmp.eq.s32.totalorder %s18, 1
      %p78 = por %p76, %p77
      %p79 = scmp.ne.s32.totalorder %s68, %s69
      %p80 = scmp.eq.s32.totalorder %s18, 0
      %p81 = por %p79, %p80
      %p82 = scmp.ne.s32.totalorder %s68, %s69
      %p83 = scmp.eq.s32.totalorder %s19, 1
      %p84 = por %p82, %p83
      %p86 = scmp.ne.s32.totalorder %s69, %s85
      %p87 = scmp.eq.s32.totalorder %s19, 0
      %p88 = por %p86, %p87
      %p89 = scmp.le.s32.totalorder 1, %s13
      %p90 = scmp.lt.s32.totalorder %s13, 3
      %p91 = pnand %p89, %p90
      %p92 = pneg %p91
      // Predicated region
      $region9: #{tpu_custom_call.1} parent=5 // pred_check
        _
      $region10: #{tpu_custom_call.1} parent=5 // pred_check_branch
        %94 = sbr.rel (%p91) target = $region12
      $region11: #{tpu_custom_call.1} parent=5 // pred_region
        %s95 = ssub.s32 %s13, 1
      $region12: #{tpu_custom_call.1} parent=5 // pred_fallthru
        _
      %p96 = scmp.lt.s32.totalorder %s13, 2
      // Predicated region
      $region13: #{tpu_custom_call.1} parent=5 // pred_check
        %p97 = pneg %p96
      $region14: #{tpu_custom_call.1} parent=5 // pred_check_branch
        %99 = sbr.rel (%p97) target = $region16
      $region15: #{tpu_custom_call.1} parent=5 // pred_region
        // Predicated region
        $region17: #{tpu_custom_call.1} parent=15 // pred_check
          %p100 = pneg %p47
        $region18: #{tpu_custom_call.1} parent=15 // pred_check_branch
          %102 = sbr.rel (%p100) target = $region20
        $region19: #{tpu_custom_call.1} parent=15 // pred_region
          %s103 = sand.u32 %s37, 1
          %s104 = scalar_lea.sflag [#allocation3], %s103
          %s105 = sand.u32 %s37, 1
          %s106 = smul.addr %s105, 8
          %s107 = scalar_lea.vmem [#allocation2], %s106
          %s108 = smul.u32 4, %s21
          %110 = vsyncadd %s104, 0
          %s111 = smul.addr %s20, 8
          %s112 = sadd.s32 %s108, %s111
          %s113 = smul.addr %s112, 2
          %s114 = scalar_lea.hbm %s0, %s113
          %s116 = sshll.u32 %s114, 4
          %s117 = int_to_ptr.hbm [resolvable:$true] %s116
          %s118 = sshll.u32 %s107, 4
          %s119 = int_to_ptr.vmem [resolvable:$true] %s118
          %121 = dma.hbm_to_vmem [thread:$0]  %s117, 128, %s119, %s104
        $region20: #{tpu_custom_call.1} parent=15 // pred_fallthru
          _
      $region16: #{tpu_custom_call.1} parent=5 // pred_fallthru
        _
      %p122 = scmp.le.s32.totalorder 1, %s13
      %p123 = scmp.lt.s32.totalorder %s13, 3
      %p124 = pnand %p122, %p123
      %p125 = pneg %p124
      // Predicated region
      $region21: #{tpu_custom_call.1} parent=5 // pred_check
        _
      $region22: #{tpu_custom_call.1} parent=5 // pred_check_branch
        %127 = sbr.rel (%p124) target = $region24
      $region23: #{tpu_custom_call.1} parent=5 // pred_region
        %s128 = ssub.s32 %s13, 1
        %s129 = sand.u32 %s40, 1
        %s130 = scalar_lea.sflag [#allocation3], %s129
        %s131 = sand.u32 %s40, 1
        %s132 = smul.addr %s131, 8
        %s133 = scalar_lea.vmem [#allocation2], %s132
        // Predicated region
        $region25: #{tpu_custom_call.1} parent=23 // pred_check
          %p134 = pneg %p53
        $region26: #{tpu_custom_call.1} parent=23 // pred_check_branch
          %136 = sbr.rel (%p134) target = $region28
        $region27: #{tpu_custom_call.1} parent=23 // pred_region
          %138 = dma.done %s130, 128
        $region28: #{tpu_custom_call.1} parent=23 // pred_fallthru
          _
        %s139 = sand.u32 %s40, 1
        %s140 = scalar_lea.sflag [#allocation3], %s139
        %s141 = sand.u32 %s40, 1
        %s142 = smul.addr %s141, 8
        %s143 = scalar_lea.vmem [#allocation2], %s142
        %p144 = pneg %p53
        %p145 = pneg %p50
        %p146 = pneg %p81
        %p147 = pneg %p78
        %s148 = sand.u32 %s68, 1
        %s149 = scalar_lea.sflag [#allocation4], %s148
        %s150 = sand.u32 %s68, 1
        %s151 = smul.addr %s150, 8
        %s152 = scalar_lea.vmem [#allocation5], %s151
        %s153 = smul.u32 4, %s23
        %s154 = smul.u32 4, %s23
        %v155 = vld [vmem:[%s133] sm:$0xff]
        %156 = vst [vmem:[%s152] sm:$0xff] %v155
        %s157 = sand.u32 %s68, 1
        %s158 = scalar_lea.sflag [#allocation4], %s157
        %s159 = sand.u32 %s68, 1
        %s160 = smul.addr %s159, 8
        %s161 = scalar_lea.vmem [#allocation5], %s160
        // Predicated region
        $region29: #{tpu_custom_call.1} parent=23 // pred_check
          %p162 = pneg %p78
        $region30: #{tpu_custom_call.1} parent=23 // pred_check_branch
          %164 = sbr.rel (%p162) target = $region32
        $region31: #{tpu_custom_call.1} parent=23 // pred_region
          %s165 = smul.u32 4, %s23
          %167 = vsyncadd %s158, 0
          %s168 = smul.addr %s22, 8
          %s169 = sadd.s32 %s165, %s168
          %s170 = smul.addr %s169, 2
          %s171 = scalar_lea.hbm %s1, %s170
          %s173 = sshll.u32 %s161, 4
          %s174 = int_to_ptr.vmem [resolvable:$true] %s173
          %s175 = sshll.u32 %s171, 4
          %s176 = int_to_ptr.hbm [resolvable:$true] %s175
          %178 = dma.vmem_to_hbm [thread:$0]  %s174, 128, %s176, %s158
        $region32: #{tpu_custom_call.1} parent=23 // pred_fallthru
          _
      $region24: #{tpu_custom_call.1} parent=5 // pred_fallthru
        _
      %p179 = scmp.le.s32.totalorder 2, %s13
      // Predicated region
      $region33: #{tpu_custom_call.1} parent=5 // pred_check
        %p180 = pneg %p179
      $region34: #{tpu_custom_call.1} parent=5 // pred_check_branch
        %182 = sbr.rel (%p180) target = $region36
      $region35: #{tpu_custom_call.1} parent=5 // pred_region
        %s183 = ssub.s32 %s13, 2
        // Predicated region
        $region37: #{tpu_custom_call.1} parent=35 // pred_check
          %p184 = pneg %p84
        $region38: #{tpu_custom_call.1} parent=35 // pred_check_branch
          %186 = sbr.rel (%p184) target = $region40
        $region39: #{tpu_custom_call.1} parent=35 // pred_region
          %s187 = sand.u32 %s69, 1
          %s188 = scalar_lea.sflag [#allocation4], %s187
          %s189 = sand.u32 %s69, 1
          %s190 = smul.addr %s189, 8
          %s191 = scalar_lea.vmem [#allocation5], %s190
          %193 = dma.done %s188, 128
        $region40: #{tpu_custom_call.1} parent=35 // pred_fallthru
          _
      $region36: #{tpu_custom_call.1} parent=5 // pred_fallthru
        _
    $region6: #{tpu_custom_call.1} parent=1 // loop_footer
      %s17 = sadd.s32 1, %s13
    $region7: #{tpu_custom_call.1} parent=1 // loop_footer_branch
      %12 = sbr.rel target = $region3
    $region8: #{tpu_custom_call.1} parent=1 // loop_exit
      _
    %194 = vsyncpa [#allocation3], 1
    %s195 = scalar_lea.sflag [#allocation3], 1
    %196 = vsyncpa %s195, 1
    %197 = vsyncpa [#allocation4], 1
    %s198 = scalar_lea.sflag [#allocation4], 1
    %199 = vsyncpa %s198, 1

</llo_original>
